<compile_context>
chip_gen: v7x
topology: tpu7x:2x2x1
jax: 0.10.0
libtpu: 0.0.40
codegen_flags: <defaults>
</compile_context>

<pallas_src>
import jax
import jax.numpy as jnp
from jax.experimental import pallas as pl
from jax.experimental.pallas import tpu as pltpu

# Problem sizes (small, consistent with the module's forward signature).
N = 64    # number of graph nodes
F = 32    # input feature dim
H = 32    # encoder hidden dim
D = 16    # latent dim
B = 8     # number of (user, item, neg_item) triples


# ----------------------- fused encoder + decoder kernel ----------------------
def vgae_fused_kernel(x_ref, w1_ref, b1_ref, wm_ref, bm_ref, ws_ref, bs_ref,
                      eps_ref, u_ref, i_ref, j_ref, loss_ref):
    # Encoder hidden layer: h = relu(x @ W1 + b1)                      (N, H)
    h = jnp.dot(x_ref[...], w1_ref[...], preferred_element_type=jnp.float32)
    h = jnp.maximum(h + b1_ref[...], 0.0)

    # Separate mean / logstd heads (no in-vreg lane slicing).          (N, D)
    mean = jnp.dot(h, wm_ref[...], preferred_element_type=jnp.float32) + bm_ref[...]
    logstd = jnp.dot(h, ws_ref[...], preferred_element_type=jnp.float32) + bs_ref[...]
    std = jnp.exp(logstd)

    # Reparameterization: z = mean + eps * std                         (N, D)
    z = mean + eps_ref[...] * std

    # KL(N(mean, std) || N(0, 1)), averaged over nodes; uses logstd directly.
    kl_elems = 1.0 + 2.0 * logstd - mean * mean - std * std            # (N, D)
    kl = -0.5 * jnp.sum(kl_elems) * (1.0 / N)

    # In-kernel gather of user rows and (item - neg) row differences via
    # one-hot MXU matmuls.  u/i/j refs are (B, 1) int32 node indices.
    cols = jax.lax.broadcasted_iota(jnp.int32, (B, N), 1)              # (B, N)
    u_onehot = (cols == u_ref[...]).astype(jnp.float32)                # (B, N)
    d_onehot = ((cols == i_ref[...]).astype(jnp.float32)
                - (cols == j_ref[...]).astype(jnp.float32))            # (B, N)
    u_emb = jnp.dot(u_onehot, z, preferred_element_type=jnp.float32)   # (B, D)
    d_emb = jnp.dot(d_onehot, z, preferred_element_type=jnp.float32)   # (B, D)

    # BPR loss: -log(sigmoid(pos - neg)) == softplus(-(pos - neg)), stable.
    diff = jnp.sum(u_emb * d_emb, axis=-1, keepdims=True)              # (B, 1)
    sp = jnp.maximum(-diff, 0.0) + jnp.log(1.0 + jnp.exp(-jnp.abs(diff)))
    bpr = jnp.sum(sp) * (1.0 / B)

    loss_ref[0, 0] = bpr + kl


# --------------------------------- wrapper ----------------------------------
def vgae_forward(data, users, items, neg_items, params, eps):
    # users/items/neg_items are (B, 1) int32; params are passed straight
    # through -> no per-call XLA ops outside the single fused kernel.
    w1, b1, wm, bm, ws, bs = params

    flops = 2 * (N * F * H + 2 * N * H * D + 2 * B * N * D)
    bytes_accessed = 4 * (N * F + F * H + H + 2 * (H * D + D) + N * D
                          + 3 * B + 1)
    cost = pl.CostEstimate(flops=flops,
                           transcendentals=N * D + B,
                           bytes_accessed=bytes_accessed)

    vmem = pl.BlockSpec(memory_space=pltpu.MemorySpace.VMEM)
    loss = pl.pallas_call(
        vgae_fused_kernel,
        out_shape=jax.ShapeDtypeStruct((1, 1), jnp.float32),
        in_specs=[vmem] * 11,   # x, W1, b1, Wm, bm, Ws, bs, eps, u, i, j
        out_specs=pl.BlockSpec(memory_space=pltpu.MemorySpace.SMEM),
        cost_estimate=cost,
    )(data, w1, b1, wm, bm, ws, bs, eps, users, items, neg_items)

    return loss[0, 0]


# -------------------------- pure-JAX reference (check) -----------------------
def vgae_reference(data, users, items, neg_items, params, eps):
    w1, b1, wm, bm, ws, bs = params
    hp = jax.lax.Precision.HIGHEST
    h = jnp.maximum(jnp.dot(data, w1, precision=hp) + b1, 0.0)
    mean = jnp.dot(h, wm, precision=hp) + bm
    logstd = jnp.dot(h, ws, precision=hp) + bs
    std = jnp.exp(logstd)
    z = mean + eps * std
    kl = -0.5 * jnp.mean(
        jnp.sum(1.0 + 2.0 * logstd - mean * mean - std * std, axis=-1))
    u = z[users[:, 0]]
    i = z[items[:, 0]]
    j = z[neg_items[:, 0]]
    diff = jnp.sum(u * i, axis=-1) - jnp.sum(u * j, axis=-1)
    sp = jnp.maximum(-diff, 0.0) + jnp.log(1.0 + jnp.exp(-jnp.abs(diff)))
    return jnp.mean(sp) + kl


if __name__ == "__main__":
    key = jax.random.PRNGKey(0)
    k_data, k_w1, k_b1, k_wm, k_bm, k_ws, k_bs, k_eps, k_u, k_i, k_j = (
        jax.random.split(key, 11)
    )

    data = jax.random.normal(k_data, (N, F), dtype=jnp.float32)

    # Deterministic parameter init (small scale to keep exp(logstd) tame).
    w1 = 0.1 * jax.random.normal(k_w1, (F, H), dtype=jnp.float32)
    b1 = 0.01 * jax.random.normal(k_b1, (1, H), dtype=jnp.float32)
    wm = 0.1 * jax.random.normal(k_wm, (H, D), dtype=jnp.float32)
    bm = 0.01 * jax.random.normal(k_bm, (1, D), dtype=jnp.float32)
    ws = 0.1 * jax.random.normal(k_ws, (H, D), dtype=jnp.float32)
    bs = 0.01 * jax.random.normal(k_bs, (1, D), dtype=jnp.float32)
    params = (w1, b1, wm, bm, ws, bs)

    # Reparameterization noise (deterministic).
    eps = jax.random.normal(k_eps, (N, D), dtype=jnp.float32)

    # Index triples built once as (B, 1) int32 columns (no per-call reshapes).
    users = jax.random.randint(k_u, (B, 1), 0, N, dtype=jnp.int32)
    items = jax.random.randint(k_i, (B, 1), 0, N, dtype=jnp.int32)
    neg_items = jax.random.randint(k_j, (B, 1), 0, N, dtype=jnp.int32)

    loss = vgae_forward(data, users, items, neg_items, params, eps)
    jax.block_until_ready(loss)
    assert loss.shape == () and jnp.isfinite(loss)

    ref = vgae_reference(data, users, items, neg_items, params, eps)
    assert jnp.allclose(loss, ref, rtol=1e-3, atol=1e-3)

    print("KERNEL_OK")
</pallas_src>

<mosaic_0001>
module attributes {stable_mosaic.version = 11 : i64} {
  func.func @vgae_fused_kernel(%arg0: memref<64x32xf32, #tpu.memory_space<vmem>>, %arg1: memref<32x32xf32, #tpu.memory_space<vmem>>, %arg2: memref<1x32xf32, #tpu.memory_space<vmem>>, %arg3: memref<32x16xf32, #tpu.memory_space<vmem>>, %arg4: memref<1x16xf32, #tpu.memory_space<vmem>>, %arg5: memref<32x16xf32, #tpu.memory_space<vmem>>, %arg6: memref<1x16xf32, #tpu.memory_space<vmem>>, %arg7: memref<64x16xf32, #tpu.memory_space<vmem>>, %arg8: memref<8x1xi32, #tpu.memory_space<vmem>>, %arg9: memref<8x1xi32, #tpu.memory_space<vmem>>, %arg10: memref<8x1xi32, #tpu.memory_space<vmem>>, %arg11: memref<1x1xf32, #tpu.memory_space<smem>>) attributes {dimension_semantics = [], scalar_prefetch = 0 : i64, scratch_operands = 0 : i64, tpu.core_type = #tpu.core_type<tc>} {
    %c0 = arith.constant 0 : index
    %c0_0 = arith.constant 0 : index
    %0 = vector.load %arg0[%c0, %c0_0] : memref<64x32xf32, #tpu.memory_space<vmem>>, vector<64x32xf32>
    %c0_1 = arith.constant 0 : index
    %c0_2 = arith.constant 0 : index
    %1 = vector.load %arg1[%c0_1, %c0_2] : memref<32x32xf32, #tpu.memory_space<vmem>>, vector<32x32xf32>
    %cst = arith.constant dense<0.000000e+00> : vector<64x32xf32>
    %2 = tpu.matmul %0, %1, %cst {dimension_numbers = #tpu.dot_dimension_numbers<[1], [0], [0], [1], [0, 0, 1, 1], [], []>} : vector<64x32xf32>, vector<32x32xf32>, vector<64x32xf32> -> vector<64x32xf32>
    %c0_3 = arith.constant 0 : index
    %c0_4 = arith.constant 0 : index
    %3 = vector.load %arg2[%c0_3, %c0_4] : memref<1x32xf32, #tpu.memory_space<vmem>>, vector<1x32xf32>
    %4 = vector.broadcast %3 : vector<1x32xf32> to vector<64x32xf32>
    %5 = arith.addf %2, %4 : vector<64x32xf32>
    %cst_5 = arith.constant 0.000000e+00 : f32
    %6 = vector.broadcast %cst_5 : f32 to vector<64x32xf32>
    %7 = arith.maximumf %5, %6 : vector<64x32xf32>
    %c0_6 = arith.constant 0 : index
    %c0_7 = arith.constant 0 : index
    %8 = vector.load %arg3[%c0_6, %c0_7] : memref<32x16xf32, #tpu.memory_space<vmem>>, vector<32x16xf32>
    %cst_8 = arith.constant dense<0.000000e+00> : vector<64x16xf32>
    %9 = tpu.matmul %7, %8, %cst_8 {dimension_numbers = #tpu.dot_dimension_numbers<[1], [0], [0], [1], [0, 0, 1, 1], [], []>} : vector<64x32xf32>, vector<32x16xf32>, vector<64x16xf32> -> vector<64x16xf32>
    %c0_9 = arith.constant 0 : index
    %c0_10 = arith.constant 0 : index
    %10 = vector.load %arg4[%c0_9, %c0_10] : memref<1x16xf32, #tpu.memory_space<vmem>>, vector<1x16xf32>
    %11 = vector.broadcast %10 : vector<1x16xf32> to vector<64x16xf32>
    %12 = arith.addf %9, %11 : vector<64x16xf32>
    %c0_11 = arith.constant 0 : index
    %c0_12 = arith.constant 0 : index
    %13 = vector.load %arg5[%c0_11, %c0_12] : memref<32x16xf32, #tpu.memory_space<vmem>>, vector<32x16xf32>
    %cst_13 = arith.constant dense<0.000000e+00> : vector<64x16xf32>
    %14 = tpu.matmul %7, %13, %cst_13 {dimension_numbers = #tpu.dot_dimension_numbers<[1], [0], [0], [1], [0, 0, 1, 1], [], []>} : vector<64x32xf32>, vector<32x16xf32>, vector<64x16xf32> -> vector<64x16xf32>
    %c0_14 = arith.constant 0 : index
    %c0_15 = arith.constant 0 : index
    %15 = vector.load %arg6[%c0_14, %c0_15] : memref<1x16xf32, #tpu.memory_space<vmem>>, vector<1x16xf32>
    %16 = vector.broadcast %15 : vector<1x16xf32> to vector<64x16xf32>
    %17 = arith.addf %14, %16 : vector<64x16xf32>
    %18 = math.exp %17 : vector<64x16xf32>
    %c0_16 = arith.constant 0 : index
    %c0_17 = arith.constant 0 : index
    %19 = vector.load %arg7[%c0_16, %c0_17] : memref<64x16xf32, #tpu.memory_space<vmem>>, vector<64x16xf32>
    %20 = arith.mulf %19, %18 : vector<64x16xf32>
    %21 = arith.addf %12, %20 : vector<64x16xf32>
    %cst_18 = arith.constant 2.000000e+00 : f32
    %22 = vector.broadcast %cst_18 : f32 to vector<64x16xf32>
    %23 = arith.mulf %22, %17 : vector<64x16xf32>
    %cst_19 = arith.constant 1.000000e+00 : f32
    %24 = vector.broadcast %cst_19 : f32 to vector<64x16xf32>
    %25 = arith.addf %24, %23 : vector<64x16xf32>
    %26 = arith.mulf %12, %12 : vector<64x16xf32>
    %27 = arith.subf %25, %26 : vector<64x16xf32>
    %28 = arith.mulf %18, %18 : vector<64x16xf32>
    %29 = arith.subf %27, %28 : vector<64x16xf32>
    %30 = vector.shape_cast %29 : vector<64x16xf32> to vector<1x64x16xf32>
    %cst_20 = arith.constant dense<0.000000e+00> : vector<1xf32>
    %31 = vector.multi_reduction <add>, %30, %cst_20 [1, 2] : vector<1x64x16xf32> to vector<1xf32>
    %32 = vector.shape_cast %31 : vector<1xf32> to vector<1x1x1xf32>
    %33 = vector.extract %32[0, 0, 0] : f32 from vector<1x1x1xf32>
    %cst_21 = arith.constant -5.000000e-01 : f32
    %34 = arith.mulf %cst_21, %33 : f32
    %cst_22 = arith.constant 1.562500e-02 : f32
    %35 = arith.mulf %34, %cst_22 : f32
    %36 = tpu.iota {dimensions = array<i32: 1>} : vector<8x64xi32>
    %c0_23 = arith.constant 0 : index
    %c0_24 = arith.constant 0 : index
    %37 = vector.load %arg8[%c0_23, %c0_24] : memref<8x1xi32, #tpu.memory_space<vmem>>, vector<8x1xi32>
    %38 = vector.broadcast %37 : vector<8x1xi32> to vector<8x64xi32>
    %39 = arith.cmpi eq, %36, %38 : vector<8x64xi32>
    %40 = arith.extui %39 : vector<8x64xi1> to vector<8x64xi32>
    %41 = arith.sitofp %40 : vector<8x64xi32> to vector<8x64xf32>
    %c0_25 = arith.constant 0 : index
    %c0_26 = arith.constant 0 : index
    %42 = vector.load %arg9[%c0_25, %c0_26] : memref<8x1xi32, #tpu.memory_space<vmem>>, vector<8x1xi32>
    %43 = vector.broadcast %42 : vector<8x1xi32> to vector<8x64xi32>
    %44 = arith.cmpi eq, %36, %43 : vector<8x64xi32>
    %45 = arith.extui %44 : vector<8x64xi1> to vector<8x64xi32>
    %46 = arith.sitofp %45 : vector<8x64xi32> to vector<8x64xf32>
    %c0_27 = arith.constant 0 : index
    %c0_28 = arith.constant 0 : index
    %47 = vector.load %arg10[%c0_27, %c0_28] : memref<8x1xi32, #tpu.memory_space<vmem>>, vector<8x1xi32>
    %48 = vector.broadcast %47 : vector<8x1xi32> to vector<8x64xi32>
    %49 = arith.cmpi eq, %36, %48 : vector<8x64xi32>
    %50 = arith.extui %49 : vector<8x64xi1> to vector<8x64xi32>
    %51 = arith.sitofp %50 : vector<8x64xi32> to vector<8x64xf32>
    %52 = arith.subf %46, %51 : vector<8x64xf32>
    %cst_29 = arith.constant dense<0.000000e+00> : vector<8x16xf32>
    %53 = tpu.matmul %41, %21, %cst_29 {dimension_numbers = #tpu.dot_dimension_numbers<[1], [0], [0], [1], [0, 0, 1, 1], [], []>} : vector<8x64xf32>, vector<64x16xf32>, vector<8x16xf32> -> vector<8x16xf32>
    %cst_30 = arith.constant dense<0.000000e+00> : vector<8x16xf32>
    %54 = tpu.matmul %52, %21, %cst_30 {dimension_numbers = #tpu.dot_dimension_numbers<[1], [0], [0], [1], [0, 0, 1, 1], [], []>} : vector<8x64xf32>, vector<64x16xf32>, vector<8x16xf32> -> vector<8x16xf32>
    %55 = arith.mulf %53, %54 : vector<8x16xf32>
    %cst_31 = arith.constant dense<0.000000e+00> : vector<8xf32>
    %56 = vector.multi_reduction <add>, %55, %cst_31 [1] : vector<8x16xf32> to vector<8xf32>
    %57 = vector.shape_cast %56 : vector<8xf32> to vector<8x1xf32>
    %cst_32 = arith.constant 0.000000e+00 : f32
    %58 = vector.broadcast %cst_32 : f32 to vector<8x1xf32>
    %59 = arith.subf %58, %57 : vector<8x1xf32>
    %cst_33 = arith.constant 0.000000e+00 : f32
    %60 = vector.broadcast %cst_33 : f32 to vector<8x1xf32>
    %61 = arith.maximumf %59, %60 : vector<8x1xf32>
    %62 = math.absf %57 : vector<8x1xf32>
    %cst_34 = arith.constant 0.000000e+00 : f32
    %63 = vector.broadcast %cst_34 : f32 to vector<8x1xf32>
    %64 = arith.subf %63, %62 : vector<8x1xf32>
    %65 = math.exp %64 : vector<8x1xf32>
    %cst_35 = arith.constant 1.000000e+00 : f32
    %66 = vector.broadcast %cst_35 : f32 to vector<8x1xf32>
    %67 = arith.addf %66, %65 : vector<8x1xf32>
    %68 = math.log %67 : vector<8x1xf32>
    %69 = arith.addf %61, %68 : vector<8x1xf32>
    %70 = vector.shape_cast %69 : vector<8x1xf32> to vector<1x8x1xf32>
    %cst_36 = arith.constant dense<0.000000e+00> : vector<1xf32>
    %71 = vector.multi_reduction <add>, %70, %cst_36 [1, 2] : vector<1x8x1xf32> to vector<1xf32>
    %72 = vector.shape_cast %71 : vector<1xf32> to vector<1x1x1xf32>
    %73 = vector.extract %72[0, 0, 0] : f32 from vector<1x1x1xf32>
    %cst_37 = arith.constant 1.250000e-01 : f32
    %74 = arith.mulf %73, %cst_37 : f32
    %75 = arith.addf %74, %35 : f32
    %c0_38 = arith.constant 0 : index
    %c0_39 = arith.constant 0 : index
    %76 = memref.load %arg11[%c0_38, %c0_39] : memref<1x1xf32, #tpu.memory_space<smem>>
    memref.store %75, %arg11[%c0_38, %c0_39] : memref<1x1xf32, #tpu.memory_space<smem>>
    return
  }
}

</mosaic_0001>

<llo_original>
// kernel: tpu_custom_call.1
$region0: #{tpu_custom_call.1}
  #allocation0 [shape = 'u32[]', space=smem, size = 0x4, offset = 0x4, fixed_abs, tag = 'smem constant byte address 0x4 - core index']
  #allocation1 [shape = 'u32[144,128]{1,0:T(1,128)}', space=vmem, size = 0x12000, scoped, tag = 'internal scratch']
  %s0 = inlined_call_operand.vmem [shape: f32[64,32], index: 0, kind: input, shape index: {}]
  %s1 = inlined_call_operand.vmem [shape: f32[32,32], index: 1, kind: input, shape index: {}]
  %s2 = inlined_call_operand.vmem [shape: f32[1,32], index: 2, kind: input, shape index: {}]
  %s3 = inlined_call_operand.vmem [shape: f32[32,16], index: 3, kind: input, shape index: {}]
  %s4 = inlined_call_operand.vmem [shape: f32[1,16], index: 4, kind: input, shape index: {}]
  %s5 = inlined_call_operand.vmem [shape: f32[32,16], index: 5, kind: input, shape index: {}]
  %s6 = inlined_call_operand.vmem [shape: f32[1,16], index: 6, kind: input, shape index: {}]
  %s7 = inlined_call_operand.vmem [shape: f32[64,16], index: 7, kind: input, shape index: {}]
  %s8 = inlined_call_operand.vmem [shape: s32[8,1], index: 8, kind: input, shape index: {}]
  %s9 = inlined_call_operand.vmem [shape: s32[8,1], index: 9, kind: input, shape index: {}]
  %s10 = inlined_call_operand.vmem [shape: s32[8,1], index: 10, kind: input, shape index: {}]
  %s11 = inlined_call_operand.hbm [shape: f32[1,1], index: 11, kind: output, shape index: {}]
  %s12 = sld [smem:[#allocation0]]
  $region54: #{tpu_custom_call.1} parent=0
    _
  %s14 = ssub.s32 1, %s12
  %s15 = scalar_select 0, %s14, %s12
  $region1: #{tpu_custom_call.1} parent=0
    #allocation2 [shape = 'u8[512]{0}', space=smem, size = 0x200, scoped, tag = 'output window, operand 0, single buffered']
    #allocation3 [shape = 's32[1]{0}', space=sflag, size = 0x4, scoped, tag = 'scoped memory for tpu_custom_call.1']
    %16 = vsyncpa [#allocation3], 0
    // Predicated region
    $region2: #{tpu_custom_call.1} parent=1 // pred_check
      _
    $region3: #{tpu_custom_call.1} parent=1 // pred_check_branch
      %18 = sbr.rel (0) target = $region5
    $region4: #{tpu_custom_call.1} parent=1 // pred_region
      _
    $region5: #{tpu_custom_call.1} parent=1 // pred_fallthru
      _
    // Predicated region
    $region6: #{tpu_custom_call.1} parent=1 // pred_check
      _
    $region7: #{tpu_custom_call.1} parent=1 // pred_check_branch
      %20 = sbr.rel (0) target = $region9
    $region8: #{tpu_custom_call.1} parent=1 // pred_region
      _
    $region9: #{tpu_custom_call.1} parent=1 // pred_fallthru
      _
    // Predicated region
    $region10: #{tpu_custom_call.1} parent=1 // pred_check
      _
    $region11: #{tpu_custom_call.1} parent=1 // pred_check_branch
      %22 = sbr.rel (0) target = $region13
    $region12: #{tpu_custom_call.1} parent=1 // pred_region
      _
    $region13: #{tpu_custom_call.1} parent=1 // pred_fallthru
      _
    // Predicated region
    $region14: #{tpu_custom_call.1} parent=1 // pred_check
      _
    $region15: #{tpu_custom_call.1} parent=1 // pred_check_branch
      %24 = sbr.rel (0) target = $region17
    $region16: #{tpu_custom_call.1} parent=1 // pred_region
      _
    $region17: #{tpu_custom_call.1} parent=1 // pred_fallthru
      _
    // Predicated region
    $region18: #{tpu_custom_call.1} parent=1 // pred_check
      _
    $region19: #{tpu_custom_call.1} parent=1 // pred_check_branch
      %26 = sbr.rel (0) target = $region21
    $region20: #{tpu_custom_call.1} parent=1 // pred_region
      _
    $region21: #{tpu_custom_call.1} parent=1 // pred_fallthru
      _
    // Predicated region
    $region22: #{tpu_custom_call.1} parent=1 // pred_check
      _
    $region23: #{tpu_custom_call.1} parent=1 // pred_check_branch
      %28 = sbr.rel (0) target = $region25
    $region24: #{tpu_custom_call.1} parent=1 // pred_region
      _
    $region25: #{tpu_custom_call.1} parent=1 // pred_fallthru
      _
    // Predicated region
    $region26: #{tpu_custom_call.1} parent=1 // pred_check
      _
    $region27: #{tpu_custom_call.1} parent=1 // pred_check_branch
      %30 = sbr.rel (0) target = $region29
    $region28: #{tpu_custom_call.1} parent=1 // pred_region
      _
    $region29: #{tpu_custom_call.1} parent=1 // pred_fallthru
      _
    // Predicated region
    $region30: #{tpu_custom_call.1} parent=1 // pred_check
      _
    $region31: #{tpu_custom_call.1} parent=1 // pred_check_branch
      %32 = sbr.rel (0) target = $region33
    $region32: #{tpu_custom_call.1} parent=1 // pred_region
      _
    $region33: #{tpu_custom_call.1} parent=1 // pred_fallthru
      _
    // Predicated region
    $region34: #{tpu_custom_call.1} parent=1 // pred_check
      _
    $region35: #{tpu_custom_call.1} parent=1 // pred_check_branch
      %34 = sbr.rel (0) target = $region37
    $region36: #{tpu_custom_call.1} parent=1 // pred_region
      _
    $region37: #{tpu_custom_call.1} parent=1 // pred_fallthru
      _
    // Predicated region
    $region38: #{tpu_custom_call.1} parent=1 // pred_check
      _
    $region39: #{tpu_custom_call.1} parent=1 // pred_check_branch
      %36 = sbr.rel (0) target = $region41
    $region40: #{tpu_custom_call.1} parent=1 // pred_region
      _
    $region41: #{tpu_custom_call.1} parent=1 // pred_fallthru
      _
    // Predicated region
    $region42: #{tpu_custom_call.1} parent=1 // pred_check
      _
    $region43: #{tpu_custom_call.1} parent=1 // pred_check_branch
      %38 = sbr.rel (0) target = $region45
    $region44: #{tpu_custom_call.1} parent=1 // pred_region
      _
    $region45: #{tpu_custom_call.1} parent=1 // pred_fallthru
      _
    %v39 = vld [vmem:[%s0] sm:$0xff]
    %v40 = vld [vmem:[%s0 + $0x8] sm:$0xff]
    %v41 = vld [vmem:[%s0 + $0x10] sm:$0xff]
    %v42 = vld [vmem:[%s0 + $0x18] sm:$0xff]
    %v43 = vld [vmem:[%s0 + $0x20] sm:$0xff]
    %v44 = vld [vmem:[%s0 + $0x28] sm:$0xff]
    %v45 = vld [vmem:[%s0 + $0x30] sm:$0xff]
    %v46 = vld [vmem:[%s0 + $0x38] sm:$0xff]
    %v47 = vld [vmem:[%s1] sm:$0xff]
    %v48 = vld [vmem:[%s1 + $0x8] sm:$0xff]
    %v49 = vld [vmem:[%s1 + $0x10] sm:$0xff]
    %v50 = vld [vmem:[%s1 + $0x18] sm:$0xff]
    %v51 = vld [vmem:[%s2] sm:$0x1]
    %v53 = vlaneseq
    %v54 = vshrl.u32 %v53, 7
    %v55 = vsub.s32 0, %v54
    %v56 = vrot.slane %v51, %v55
    %vm58 = vcmask 261120
    %v60 = vsel %vm58, %v39, 0
    %v63 = vsel %vm58, %v40, 0
    %v66 = vsel %vm58, %v41, 0
    %v69 = vsel %vm58, %v42, 0
    %v72 = vsel %vm58, %v43, 0
    %v75 = vsel %vm58, %v44, 0
    %v78 = vsel %vm58, %v45, 0
    %v81 = vsel %vm58, %v46, 0
    %83 = vmatprep.subr.mxu0 0.0
    %84 = vmatpush1.msra.mxu0 %v47
    %85 = vmatprep.subr.mxu0 0.0
    %86 = vmatpush1.msra.mxu0 %v48
    %87 = vmatprep.subr.mxu0 0.0
    %88 = vmatpush1.msra.mxu0 %v49
    %89 = vmatprep.subr.mxu0 0.0
    %90 = vmatpush1.msra.mxu0 %v50
    %91 = vmatprep.subr.mxu0 0.0
    %92 = vmatpush1.msra.mxu0 0.0
    %93 = vmatprep.subr.mxu0 0.0
    %94 = vmatpush1.msra.mxu0 0.0
    %95 = vmatprep.subr.mxu0 0.0
    %96 = vmatpush1.msra.mxu0 0.0
    %97 = vmatprep.subr.mxu0 0.0
    %98 = vmatpush1.msra.mxu0 0.0
    %99 = vmatprep.subr.mxu0 0.0
    %100 = vmatpush1.msra.mxu0 0.0
    %101 = vmatprep.subr.mxu0 0.0
    %102 = vmatpush1.msra.mxu0 0.0
    %103 = vmatprep.subr.mxu0 0.0
    %104 = vmatpush1.msra.mxu0 0.0
    %105 = vmatprep.subr.mxu0 0.0
    %106 = vmatpush1.msra.mxu0 0.0
    %107 = vmatprep.subr.mxu0 0.0
    %108 = vmatpush1.msra.mxu0 0.0
    %109 = vmatprep.subr.mxu0 0.0
    %110 = vmatpush1.msra.mxu0 0.0
    %111 = vmatprep.subr.mxu0 0.0
    %112 = vmatpush1.msra.mxu0 0.0
    %113 = vmatprep.subr.mxu0 0.0
    %114 = vmatpush1.msra.mxu0 0.0
    %115 = vmatprep.subr.mxu0 0.0
    %116 = vmatpush1.msra.mxu0 0.0
    %117 = vmatprep.subr.mxu0 0.0
    %118 = vmatpush1.msra.mxu0 0.0
    %119 = vmatprep.subr.mxu0 0.0
    %120 = vmatpush1.msra.mxu0 0.0
    %121 = vmatprep.subr.mxu0 0.0
    %122 = vmatpush1.msra.mxu0 0.0
    %123 = vmatprep.subr.mxu0 0.0
    %124 = vmatpush1.msra.mxu0 0.0
    %125 = vmatprep.subr.mxu0 0.0
    %126 = vmatpush1.msra.mxu0 0.0
    %127 = vmatprep.subr.mxu0 0.0
    %128 = vmatpush1.msra.mxu0 0.0
    %129 = vmatprep.subr.mxu0 0.0
    %130 = vmatpush1.msra.mxu0 0.0
    %131 = vmatprep.subr.mxu0 0.0
    %132 = vmatpush1.msra.mxu0 0.0
    %133 = vmatprep.subr.mxu0 0.0
    %134 = vmatpush1.msra.mxu0 0.0
    %135 = vmatprep.subr.mxu0 0.0
    %136 = vmatpush1.msra.mxu0 0.0
    %137 = vmatprep.subr.mxu0 0.0
    %138 = vmatpush1.msra.mxu0 0.0
    %139 = vmatprep.subr.mxu0 0.0
    %140 = vmatpush1.msra.mxu0 0.0
    %141 = vmatprep.subr.mxu0 0.0
    %142 = vmatpush1.msra.mxu0 0.0
    %143 = vmatprep.subr.mxu0 0.0
    %144 = vmatpush1.msra.mxu0 0.0
    %145 = vmatprep.subr.mxu0 0.0
    %146 = vmatpush1.msra.mxu0 0.0
    %147 = vmatprep.mubr.f32.mxu0 0.0
    %148 = vmatmul.mubr.f32.gmra.mrb[0].mxu0 %v60
    %v149 = vpop.f32.mrb[0].mxu0
    %v150 = vadd.f32 %v56, %v149
    %v151 = vpop.f32.mrb[0].mxu0
    %152 = vmatprep.mubr.f32.mxu0 0.0
    %153 = vmatmul.mubr.f32.gmra.mrb[0].mxu0 %v63
    %v154 = vpop.f32.mrb[0].mxu0
    %v155 = vadd.f32 %v56, %v154
    %v156 = vpop.f32.mrb[0].mxu0
    %157 = vmatprep.mubr.f32.mxu0 0.0
    %158 = vmatmul.mubr.f32.gmra.mrb[0].mxu0 %v66
    %v159 = vpop.f32.mrb[0].mxu0
    %v160 = vadd.f32 %v56, %v159
    %v161 = vpop.f32.mrb[0].mxu0
    %162 = vmatprep.mubr.f32.mxu0 0.0
    %163 = vmatmul.mubr.f32.gmra.mrb[0].mxu0 %v69
    %v164 = vpop.f32.mrb[0].mxu0
    %v165 = vadd.f32 %v56, %v164
    %v166 = vpop.f32.mrb[0].mxu0
    %167 = vmatprep.mubr.f32.mxu0 0.0
    %168 = vmatmul.mubr.f32.gmra.mrb[0].mxu0 %v72
    %v169 = vpop.f32.mrb[0].mxu0
    %v170 = vadd.f32 %v56, %v169
    %v171 = vpop.f32.mrb[0].mxu0
    %172 = vmatprep.mubr.f32.mxu0 0.0
    %173 = vmatmul.mubr.f32.gmra.mrb[0].mxu0 %v75
    %v174 = vpop.f32.mrb[0].mxu0
    %v175 = vadd.f32 %v56, %v174
    %v176 = vpop.f32.mrb[0].mxu0
    %177 = vmatprep.mubr.f32.mxu0 0.0
    %178 = vmatmul.mubr.f32.gmra.mrb[0].mxu0 %v78
    %v179 = vpop.f32.mrb[0].mxu0
    %v180 = vadd.f32 %v56, %v179
    %v181 = vpop.f32.mrb[0].mxu0
    %182 = vmatprep.mubr.f32.mxu0 0.0
    %183 = vmatmul.mubr.f32.gmra.mrb[0].mxu0 %v81
    %v184 = vpop.f32.mrb[0].mxu0
    %v185 = vadd.f32 %v56, %v184
    %v186 = vpop.f32.mrb[0].mxu0
    %187 = vdwg.mxu0
    %v188 = vmax.f32 %v150, 0.0
    %v189 = vmax.f32 %v155, 0.0
    %v190 = vmax.f32 %v160, 0.0
    %v191 = vmax.f32 %v165, 0.0
    %v192 = vmax.f32 %v170, 0.0
    %v193 = vmax.f32 %v175, 0.0
    %v194 = vmax.f32 %v180, 0.0
    %v195 = vmax.f32 %v185, 0.0
    %v196 = vld [vmem:[%s3] sm:$0xff]
    %v197 = vld [vmem:[%s3 + $0x8] sm:$0xff]
    %v198 = vld [vmem:[%s3 + $0x10] sm:$0xff]
    %v199 = vld [vmem:[%s3 + $0x18] sm:$0xff]
    %v200 = vld [vmem:[%s4] sm:$0x1]
    %v202 = vlaneseq
    %v203 = vshrl.u32 %v202, 7
    %v204 = vsub.s32 0, %v203
    %v205 = vrot.slane %v200, %v204
    %v208 = vsel %vm58, %v188, 0
    %v211 = vsel %vm58, %v189, 0
    %v214 = vsel %vm58, %v190, 0
    %v217 = vsel %vm58, %v191, 0
    %v220 = vsel %vm58, %v192, 0
    %v223 = vsel %vm58, %v193, 0
    %v226 = vsel %vm58, %v194, 0
    %v229 = vsel %vm58, %v195, 0
    %231 = vmatprep.subr.mxu0 0.0
    %232 = vmatpush1.msra.mxu0 %v196
    %233 = vmatprep.subr.mxu0 0.0
    %234 = vmatpush1.msra.mxu0 %v197
    %235 = vmatprep.subr.mxu0 0.0
    %236 = vmatpush1.msra.mxu0 %v198
    %237 = vmatprep.subr.mxu0 0.0
    %238 = vmatpush1.msra.mxu0 %v199
    %239 = vmatprep.subr.mxu0 0.0
    %240 = vmatpush1.msra.mxu0 0.0
    %241 = vmatprep.subr.mxu0 0.0
    %242 = vmatpush1.msra.mxu0 0.0
    %243 = vmatprep.subr.mxu0 0.0
    %244 = vmatpush1.msra.mxu0 0.0
    %245 = vmatprep.subr.mxu0 0.0
    %246 = vmatpush1.msra.mxu0 0.0
    %247 = vmatprep.subr.mxu0 0.0
    %248 = vmatpush1.msra.mxu0 0.0
    %249 = vmatprep.subr.mxu0 0.0
    %250 = vmatpush1.msra.mxu0 0.0
    %251 = vmatprep.subr.mxu0 0.0
    %252 = vmatpush1.msra.mxu0 0.0
    %253 = vmatprep.subr.mxu0 0.0
    %254 = vmatpush1.msra.mxu0 0.0
    %255 = vmatprep.subr.mxu0 0.0
    %256 = vmatpush1.msra.mxu0 0.0
    %257 = vmatprep.subr.mxu0 0.0
    %258 = vmatpush1.msra.mxu0 0.0
    %259 = vmatprep.subr.mxu0 0.0
    %260 = vmatpush1.msra.mxu0 0.0
    %261 = vmatprep.subr.mxu0 0.0
    %262 = vmatpush1.msra.mxu0 0.0
    %263 = vmatprep.subr.mxu0 0.0
    %264 = vmatpush1.msra.mxu0 0.0
    %265 = vmatprep.subr.mxu0 0.0
    %266 = vmatpush1.msra.mxu0 0.0
    %267 = vmatprep.subr.mxu0 0.0
    %268 = vmatpush1.msra.mxu0 0.0
    %269 = vmatprep.subr.mxu0 0.0
    %270 = vmatpush1.msra.mxu0 0.0
    %271 = vmatprep.subr.mxu0 0.0
    %272 = vmatpush1.msra.mxu0 0.0
    %273 = vmatprep.subr.mxu0 0.0
    %274 = vmatpush1.msra.mxu0 0.0
    %275 = vmatprep.subr.mxu0 0.0
    %276 = vmatpush1.msra.mxu0 0.0
    %277 = vmatprep.subr.mxu0 0.0
    %278 = vmatpush1.msra.mxu0 0.0
    %279 = vmatprep.subr.mxu0 0.0
    %280 = vmatpush1.msra.mxu0 0.0
    %281 = vmatprep.subr.mxu0 0.0
    %282 = vmatpush1.msra.mxu0 0.0
    %283 = vmatprep.subr.mxu0 0.0
    %284 = vmatpush1.msra.mxu0 0.0
    %285 = vmatprep.subr.mxu0 0.0
    %286 = vmatpush1.msra.mxu0 0.0
    %287 = vmatprep.subr.mxu0 0.0
    %288 = vmatpush1.msra.mxu0 0.0
    %289 = vmatprep.subr.mxu0 0.0
    %290 = vmatpush1.msra.mxu0 0.0
    %291 = vmatprep.subr.mxu0 0.0
    %292 = vmatpush1.msra.mxu0 0.0
    %293 = vmatprep.subr.mxu0 0.0
    %294 = vmatpush1.msra.mxu0 0.0
    %295 = vmatprep.mubr.f32.mxu0 0.0
    %296 = vmatmul.mubr.f32.gmra.mrb[0].mxu0 %v208
    %v297 = vpop.f32.mrb[0].mxu0
    %v298 = vadd.f32 %v205, %v297
    %v299 = vpop.f32.mrb[0].mxu0
    %300 = vmatprep.mubr.f32.mxu0 0.0
    %301 = vmatmul.mubr.f32.gmra.mrb[0].mxu0 %v211
    %v302 = vpop.f32.mrb[0].mxu0
    %v303 = vadd.f32 %v205, %v302
    %v304 = vpop.f32.mrb[0].mxu0
    %305 = vmatprep.mubr.f32.mxu0 0.0
    %306 = vmatmul.mubr.f32.gmra.mrb[0].mxu0 %v214
    %v307 = vpop.f32.mrb[0].mxu0
    %v308 = vadd.f32 %v205, %v307
    %v309 = vpop.f32.mrb[0].mxu0
    %310 = vmatprep.mubr.f32.mxu0 0.0
    %311 = vmatmul.mubr.f32.gmra.mrb[0].mxu0 %v217
    %v312 = vpop.f32.mrb[0].mxu0
    %v313 = vadd.f32 %v205, %v312
    %v314 = vpop.f32.mrb[0].mxu0
    %315 = vmatprep.mubr.f32.mxu0 0.0
    %316 = vmatmul.mubr.f32.gmra.mrb[0].mxu0 %v220
    %v317 = vpop.f32.mrb[0].mxu0
    %v318 = vadd.f32 %v205, %v317
    %v319 = vpop.f32.mrb[0].mxu0
    %320 = vmatprep.mubr.f32.mxu0 0.0
    %321 = vmatmul.mubr.f32.gmra.mrb[0].mxu0 %v223
    %v322 = vpop.f32.mrb[0].mxu0
    %v323 = vadd.f32 %v205, %v322
    %v324 = vpop.f32.mrb[0].mxu0
    %325 = vmatprep.mubr.f32.mxu0 0.0
    %326 = vmatmul.mubr.f32.gmra.mrb[0].mxu0 %v226
    %v327 = vpop.f32.mrb[0].mxu0
    %v328 = vadd.f32 %v205, %v327
    %v329 = vpop.f32.mrb[0].mxu0
    %330 = vmatprep.mubr.f32.mxu0 0.0
    %331 = vmatmul.mubr.f32.gmra.mrb[0].mxu0 %v229
    %v332 = vpop.f32.mrb[0].mxu0
    %v333 = vadd.f32 %v205, %v332
    %v334 = vpop.f32.mrb[0].mxu0
    %335 = vdwg.mxu0
    %v336 = vld [vmem:[%s5] sm:$0xff]
    %v337 = vld [vmem:[%s5 + $0x8] sm:$0xff]
    %v338 = vld [vmem:[%s5 + $0x10] sm:$0xff]
    %v339 = vld [vmem:[%s5 + $0x18] sm:$0xff]
    %v340 = vld [vmem:[%s6] sm:$0x1]
    %v342 = vlaneseq
    %v343 = vshrl.u32 %v342, 7
    %v344 = vsub.s32 0, %v343
    %v345 = vrot.slane %v340, %v344
    %347 = vmatprep.subr.mxu0 0.0
    %348 = vmatpush1.msra.mxu0 %v336
    %349 = vmatprep.subr.mxu0 0.0
    %350 = vmatpush1.msra.mxu0 %v337
    %351 = vmatprep.subr.mxu0 0.0
    %352 = vmatpush1.msra.mxu0 %v338
    %353 = vmatprep.subr.mxu0 0.0
    %354 = vmatpush1.msra.mxu0 %v339
    %355 = vmatprep.subr.mxu0 0.0
    %356 = vmatpush1.msra.mxu0 0.0
    %357 = vmatprep.subr.mxu0 0.0
    %358 = vmatpush1.msra.mxu0 0.0
    %359 = vmatprep.subr.mxu0 0.0
    %360 = vmatpush1.msra.mxu0 0.0
    %361 = vmatprep.subr.mxu0 0.0
    %362 = vmatpush1.msra.mxu0 0.0
    %363 = vmatprep.subr.mxu0 0.0
    %364 = vmatpush1.msra.mxu0 0.0
    %365 = vmatprep.subr.mxu0 0.0
    %366 = vmatpush1.msra.mxu0 0.0
    %367 = vmatprep.subr.mxu0 0.0
    %368 = vmatpush1.msra.mxu0 0.0
    %369 = vmatprep.subr.mxu0 0.0
    %370 = vmatpush1.msra.mxu0 0.0
    %371 = vmatprep.subr.mxu0 0.0
    %372 = vmatpush1.msra.mxu0 0.0
    %373 = vmatprep.subr.mxu0 0.0
    %374 = vmatpush1.msra.mxu0 0.0
    %375 = vmatprep.subr.mxu0 0.0
    %376 = vmatpush1.msra.mxu0 0.0
    %377 = vmatprep.subr.mxu0 0.0
    %378 = vmatpush1.msra.mxu0 0.0
    %379 = vmatprep.subr.mxu0 0.0
    %380 = vmatpush1.msra.mxu0 0.0
    %381 = vmatprep.subr.mxu0 0.0
    %382 = vmatpush1.msra.mxu0 0.0
    %383 = vmatprep.subr.mxu0 0.0
    %384 = vmatpush1.msra.mxu0 0.0
    %385 = vmatprep.subr.mxu0 0.0
    %386 = vmatpush1.msra.mxu0 0.0
    %387 = vmatprep.subr.mxu0 0.0
    %388 = vmatpush1.msra.mxu0 0.0
    %389 = vmatprep.subr.mxu0 0.0
    %390 = vmatpush1.msra.mxu0 0.0
    %391 = vmatprep.subr.mxu0 0.0
    %392 = vmatpush1.msra.mxu0 0.0
    %393 = vmatprep.subr.mxu0 0.0
    %394 = vmatpush1.msra.mxu0 0.0
    %395 = vmatprep.subr.mxu0 0.0
    %396 = vmatpush1.msra.mxu0 0.0
    %397 = vmatprep.subr.mxu0 0.0
    %398 = vmatpush1.msra.mxu0 0.0
    %399 = vmatprep.subr.mxu0 0.0
    %400 = vmatpush1.msra.mxu0 0.0
    %401 = vmatprep.subr.mxu0 0.0
    %402 = vmatpush1.msra.mxu0 0.0
    %403 = vmatprep.subr.mxu0 0.0
    %404 = vmatpush1.msra.mxu0 0.0
    %405 = vmatprep.subr.mxu0 0.0
    %406 = vmatpush1.msra.mxu0 0.0
    %407 = vmatprep.subr.mxu0 0.0
    %408 = vmatpush1.msra.mxu0 0.0
    %409 = vmatprep.subr.mxu0 0.0
    %410 = vmatpush1.msra.mxu0 0.0
    %411 = vmatprep.mubr.f32.mxu0 0.0
    %412 = vmatmul.mubr.f32.gmra.mrb[0].mxu0 %v208
    %v413 = vpop.f32.mrb[0].mxu0
    %v414 = vadd.f32 %v345, %v413
    %v415 = vpop.f32.mrb[0].mxu0
    %416 = vmatprep.mubr.f32.mxu0 0.0
    %417 = vmatmul.mubr.f32.gmra.mrb[0].mxu0 %v211
    %v418 = vpop.f32.mrb[0].mxu0
    %v419 = vadd.f32 %v345, %v418
    %v420 = vpop.f32.mrb[0].mxu0
    %421 = vmatprep.mubr.f32.mxu0 0.0
    %422 = vmatmul.mubr.f32.gmra.mrb[0].mxu0 %v214
    %v423 = vpop.f32.mrb[0].mxu0
    %v424 = vadd.f32 %v345, %v423
    %v425 = vpop.f32.mrb[0].mxu0
    %426 = vmatprep.mubr.f32.mxu0 0.0
    %427 = vmatmul.mubr.f32.gmra.mrb[0].mxu0 %v217
    %v428 = vpop.f32.mrb[0].mxu0
    %v429 = vadd.f32 %v345, %v428
    %v430 = vpop.f32.mrb[0].mxu0
    %431 = vmatprep.mubr.f32.mxu0 0.0
    %432 = vmatmul.mubr.f32.gmra.mrb[0].mxu0 %v220
    %v433 = vpop.f32.mrb[0].mxu0
    %v434 = vadd.f32 %v345, %v433
    %v435 = vpop.f32.mrb[0].mxu0
    %436 = vmatprep.mubr.f32.mxu0 0.0
    %437 = vmatmul.mubr.f32.gmra.mrb[0].mxu0 %v223
    %v438 = vpop.f32.mrb[0].mxu0
    %v439 = vadd.f32 %v345, %v438
    %v440 = vpop.f32.mrb[0].mxu0
    %441 = vmatprep.mubr.f32.mxu0 0.0
    %442 = vmatmul.mubr.f32.gmra.mrb[0].mxu0 %v226
    %v443 = vpop.f32.mrb[0].mxu0
    %v444 = vadd.f32 %v345, %v443
    %v445 = vpop.f32.mrb[0].mxu0
    %446 = vmatprep.mubr.f32.mxu0 0.0
    %447 = vmatmul.mubr.f32.gmra.mrb[0].mxu0 %v229
    %v448 = vpop.f32.mrb[0].mxu0
    %v449 = vadd.f32 %v345, %v448
    %v450 = vpop.f32.mrb[0].mxu0
    %451 = vdwg.mxu0
    %v452 = vmul.f32 %v414, 1.442695
    %v453 = vpow.pop %v452
    %v454 = vmul.f32 %v419, 1.442695
    %v455 = vpow.pop %v454
    %v456 = vmul.f32 %v424, 1.442695
    %v457 = vpow.pop %v456
    %v458 = vmul.f32 %v429, 1.442695
    %v459 = vpow.pop %v458
    %v460 = vmul.f32 %v434, 1.442695
    %v461 = vpow.pop %v460
    %v462 = vmul.f32 %v439, 1.442695
    %v463 = vpow.pop %v462
    %v464 = vmul.f32 %v444, 1.442695
    %v465 = vpow.pop %v464
    %v466 = vmul.f32 %v449, 1.442695
    %v467 = vpow.pop %v466
    %v468 = vld [vmem:[%s7] sm:$0xff]
    %v469 = vld [vmem:[%s7 + $0x8] sm:$0xff]
    %v470 = vld [vmem:[%s7 + $0x10] sm:$0xff]
    %v471 = vld [vmem:[%s7 + $0x18] sm:$0xff]
    %v472 = vld [vmem:[%s7 + $0x20] sm:$0xff]
    %v473 = vld [vmem:[%s7 + $0x28] sm:$0xff]
    %v474 = vld [vmem:[%s7 + $0x30] sm:$0xff]
    %v475 = vld [vmem:[%s7 + $0x38] sm:$0xff]
    %v476 = vmul.f32 %v468, %v453
    %v477 = vmul.f32 %v469, %v455
    %v478 = vmul.f32 %v470, %v457
    %v479 = vmul.f32 %v471, %v459
    %v480 = vmul.f32 %v472, %v461
    %v481 = vmul.f32 %v473, %v463
    %v482 = vmul.f32 %v474, %v465
    %v483 = vmul.f32 %v475, %v467
    %v484 = vadd.f32 %v298, %v476
    %v485 = vadd.f32 %v303, %v477
    %v486 = vadd.f32 %v308, %v478
    %v487 = vadd.f32 %v313, %v479
    %v488 = vadd.f32 %v318, %v480
    %v489 = vadd.f32 %v323, %v481
    %v490 = vadd.f32 %v328, %v482
    %v491 = vadd.f32 %v333, %v483
    %v492 = vmul.f32 %v414, 2.0
    %v493 = vmul.f32 %v419, 2.0
    %v494 = vmul.f32 %v424, 2.0
    %v495 = vmul.f32 %v429, 2.0
    %v496 = vmul.f32 %v434, 2.0
    %v497 = vmul.f32 %v439, 2.0
    %v498 = vmul.f32 %v444, 2.0
    %v499 = vmul.f32 %v449, 2.0
    %v500 = vadd.f32 %v492, 1.0
    %v501 = vadd.f32 %v493, 1.0
    %v502 = vadd.f32 %v494, 1.0
    %v503 = vadd.f32 %v495, 1.0
    %v504 = vadd.f32 %v496, 1.0
    %v505 = vadd.f32 %v497, 1.0
    %v506 = vadd.f32 %v498, 1.0
    %v507 = vadd.f32 %v499, 1.0
    %v508 = vmul.f32 %v298, %v298
    %v509 = vmul.f32 %v303, %v303
    %v510 = vmul.f32 %v308, %v308
    %v511 = vmul.f32 %v313, %v313
    %v512 = vmul.f32 %v318, %v318
    %v513 = vmul.f32 %v323, %v323
    %v514 = vmul.f32 %v328, %v328
    %v515 = vmul.f32 %v333, %v333
    %v516 = vsub.f32 %v500, %v508
    %v517 = vsub.f32 %v501, %v509
    %v518 = vsub.f32 %v502, %v510
    %v519 = vsub.f32 %v503, %v511
    %v520 = vsub.f32 %v504, %v512
    %v521 = vsub.f32 %v505, %v513
    %v522 = vsub.f32 %v506, %v514
    %v523 = vsub.f32 %v507, %v515
    %v524 = vmul.f32 %v453, %v453
    %v525 = vmul.f32 %v455, %v455
    %v526 = vmul.f32 %v457, %v457
    %v527 = vmul.f32 %v459, %v459
    %v528 = vmul.f32 %v461, %v461
    %v529 = vmul.f32 %v463, %v463
    %v530 = vmul.f32 %v465, %v465
    %v531 = vmul.f32 %v467, %v467
    %v532 = vsub.f32 %v516, %v524
    %v533 = vsub.f32 %v517, %v525
    %v534 = vsub.f32 %v518, %v526
    %v535 = vsub.f32 %v519, %v527
    %v536 = vsub.f32 %v520, %v528
    %v537 = vsub.f32 %v521, %v529
    %v538 = vsub.f32 %v522, %v530
    %v539 = vsub.f32 %v523, %v531
    %vm540 = vcmask 130048
    %v541 = vsel %vm540, %v532, 0.0
    %v542 = vsel %vm540, %v533, 0.0
    %v543 = vadd.f32 %v541, %v542
    %v544 = vsel %vm540, %v534, 0.0
    %v545 = vadd.f32 %v543, %v544
    %v546 = vsel %vm540, %v535, 0.0
    %v547 = vadd.f32 %v545, %v546
    %v548 = vsel %vm540, %v536, 0.0
    %v549 = vadd.f32 %v547, %v548
    %v550 = vsel %vm540, %v537, 0.0
    %v551 = vadd.f32 %v549, %v550
    %v552 = vsel %vm540, %v538, 0.0
    %v553 = vadd.f32 %v551, %v552
    %v554 = vsel %vm540, %v539, 0.0
    %v555 = vadd.f32 %v553, %v554
    %556 = vadd.xlane.f32.xlu0 %v555
    %v557 = vpop.xlane.xlu0 %556
    %v558 = vrot.slane %v557, 4
    %v559 = vadd.f32 %v557, %v558
    %v560 = vrot.slane %v559, 2
    %v561 = vadd.f32 %v559, %v560
    %v562 = vrot.slane %v561, 1
    %v563 = vadd.f32 %v561, %v562
    %s564 = vtos %v563
    %s565 = smul.f32 %s564, -0.5
    %s566 = smul.f32 %s565, 0.015625
    %v567 = vlaneseq
    %v568 = vand.u32 %v567, 127
    %v569 = vld [vmem:[%s8] sm:$0xff]
    %570 = vset.pattern.permute.xlu0 0
    %571 = vperm.xlu0 %570, %v569
    %v572 = vpop.permute.xlu0 %571
    %vm573 = vcmp.eq.s32.totalorder %v568, %v572
    %v574 = vsel %vm573, 1, 0
    %v575 = vcvt.s32.f32 %v574
    %v576 = vld [vmem:[%s9] sm:$0xff]
    %577 = vset.pattern.permute.xlu0 0
    %578 = vperm.xlu0 %577, %v576
    %v579 = vpop.permute.xlu0 %578
    %vm580 = vcmp.eq.s32.totalorder %v568, %v579
    %v581 = vsel %vm580, 1, 0
    %v582 = vcvt.s32.f32 %v581
    %v583 = vld [vmem:[%s10] sm:$0xff]
    %584 = vset.pattern.permute.xlu0 0
    %585 = vperm.xlu0 %584, %v583
    %v586 = vpop.permute.xlu0 %585
    %vm587 = vcmp.eq.s32.totalorder %v568, %v586
    %v588 = vsel %vm587, 1, 0
    %v589 = vcvt.s32.f32 %v588
    %v590 = vsub.f32 %v582, %v589
    %vm591 = vcmask 523264
    %v593 = vsel %vm591, %v575, 0
    %595 = vmatprep.subr.mxu0 0.0
    %596 = vmatpush1.msra.mxu0 %v484
    %597 = vmatprep.subr.mxu0 0.0
    %598 = vmatpush1.msra.mxu0 %v485
    %599 = vmatprep.subr.mxu0 0.0
    %600 = vmatpush1.msra.mxu0 %v486
    %601 = vmatprep.subr.mxu0 0.0
    %602 = vmatpush1.msra.mxu0 %v487
    %603 = vmatprep.subr.mxu0 0.0
    %604 = vmatpush1.msra.mxu0 %v488
    %605 = vmatprep.subr.mxu0 0.0
    %606 = vmatpush1.msra.mxu0 %v489
    %607 = vmatprep.subr.mxu0 0.0
    %608 = vmatpush1.msra.mxu0 %v490
    %609 = vmatprep.subr.mxu0 0.0
    %610 = vmatpush1.msra.mxu0 %v491
    %611 = vmatprep.subr.mxu0 0.0
    %612 = vmatpush1.msra.mxu0 0.0
    %613 = vmatprep.subr.mxu0 0.0
    %614 = vmatpush1.msra.mxu0 0.0
    %615 = vmatprep.subr.mxu0 0.0
    %616 = vmatpush1.msra.mxu0 0.0
    %617 = vmatprep.subr.mxu0 0.0
    %618 = vmatpush1.msra.mxu0 0.0
    %619 = vmatprep.subr.mxu0 0.0
    %620 = vmatpush1.msra.mxu0 0.0
    %621 = vmatprep.subr.mxu0 0.0
    %622 = vmatpush1.msra.mxu0 0.0
    %623 = vmatprep.subr.mxu0 0.0
    %624 = vmatpush1.msra.mxu0 0.0
    %625 = vmatprep.subr.mxu0 0.0
    %626 = vmatpush1.msra.mxu0 0.0
    %627 = vmatprep.subr.mxu0 0.0
    %628 = vmatpush1.msra.mxu0 0.0
    %629 = vmatprep.subr.mxu0 0.0
    %630 = vmatpush1.msra.mxu0 0.0
    %631 = vmatprep.subr.mxu0 0.0
    %632 = vmatpush1.msra.mxu0 0.0
    %633 = vmatprep.subr.mxu0 0.0
    %634 = vmatpush1.msra.mxu0 0.0
    %635 = vmatprep.subr.mxu0 0.0
    %636 = vmatpush1.msra.mxu0 0.0
    %637 = vmatprep.subr.mxu0 0.0
    %638 = vmatpush1.msra.mxu0 0.0
    %639 = vmatprep.subr.mxu0 0.0
    %640 = vmatpush1.msra.mxu0 0.0
    %641 = vmatprep.subr.mxu0 0.0
    %642 = vmatpush1.msra.mxu0 0.0
    %643 = vmatprep.subr.mxu0 0.0
    %644 = vmatpush1.msra.mxu0 0.0
    %645 = vmatprep.subr.mxu0 0.0
    %646 = vmatpush1.msra.mxu0 0.0
    %647 = vmatprep.subr.mxu0 0.0
    %648 = vmatpush1.msra.mxu0 0.0
    %649 = vmatprep.subr.mxu0 0.0
    %650 = vmatpush1.msra.mxu0 0.0
    %651 = vmatprep.subr.mxu0 0.0
    %652 = vmatpush1.msra.mxu0 0.0
    %653 = vmatprep.subr.mxu0 0.0
    %654 = vmatpush1.msra.mxu0 0.0
    %655 = vmatprep.subr.mxu0 0.0
    %656 = vmatpush1.msra.mxu0 0.0
    %657 = vmatprep.subr.mxu0 0.0
    %658 = vmatpush1.msra.mxu0 0.0
    %659 = vmatprep.mubr.f32.mxu0 0.0
    %660 = vmatmul.mubr.f32.gmra.mrb[0].mxu0 %v593
    %v661 = vpop.f32.mrb[0].mxu0
    %v662 = vadd.f32 0.0, %v661
    %v663 = vpop.f32.mrb[0].mxu0
    %664 = vdwg.mxu0
    %v666 = vsel %vm591, %v590, 0
    %668 = vmatprep.subr.mxu0 0.0
    %669 = vmatpush1.msra.mxu0 %v484
    %670 = vmatprep.subr.mxu0 0.0
    %671 = vmatpush1.msra.mxu0 %v485
    %672 = vmatprep.subr.mxu0 0.0
    %673 = vmatpush1.msra.mxu0 %v486
    %674 = vmatprep.subr.mxu0 0.0
    %675 = vmatpush1.msra.mxu0 %v487
    %676 = vmatprep.subr.mxu0 0.0
    %677 = vmatpush1.msra.mxu0 %v488
    %678 = vmatprep.subr.mxu0 0.0
    %679 = vmatpush1.msra.mxu0 %v489
    %680 = vmatprep.subr.mxu0 0.0
    %681 = vmatpush1.msra.mxu0 %v490
    %682 = vmatprep.subr.mxu0 0.0
    %683 = vmatpush1.msra.mxu0 %v491
    %684 = vmatprep.subr.mxu0 0.0
    %685 = vmatpush1.msra.mxu0 0.0
    %686 = vmatprep.subr.mxu0 0.0
    %687 = vmatpush1.msra.mxu0 0.0
    %688 = vmatprep.subr.mxu0 0.0
    %689 = vmatpush1.msra.mxu0 0.0
    %690 = vmatprep.subr.mxu0 0.0
    %691 = vmatpush1.msra.mxu0 0.0
    %692 = vmatprep.subr.mxu0 0.0
    %693 = vmatpush1.msra.mxu0 0.0
    %694 = vmatprep.subr.mxu0 0.0
    %695 = vmatpush1.msra.mxu0 0.0
    %696 = vmatprep.subr.mxu0 0.0
    %697 = vmatpush1.msra.mxu0 0.0
    %698 = vmatprep.subr.mxu0 0.0
    %699 = vmatpush1.msra.mxu0 0.0
    %700 = vmatprep.subr.mxu0 0.0
    %701 = vmatpush1.msra.mxu0 0.0
    %702 = vmatprep.subr.mxu0 0.0
    %703 = vmatpush1.msra.mxu0 0.0
    %704 = vmatprep.subr.mxu0 0.0
    %705 = vmatpush1.msra.mxu0 0.0
    %706 = vmatprep.subr.mxu0 0.0
    %707 = vmatpush1.msra.mxu0 0.0
    %708 = vmatprep.subr.mxu0 0.0
    %709 = vmatpush1.msra.mxu0 0.0
    %710 = vmatprep.subr.mxu0 0.0
    %711 = vmatpush1.msra.mxu0 0.0
    %712 = vmatprep.subr.mxu0 0.0
    %713 = vmatpush1.msra.mxu0 0.0
    %714 = vmatprep.subr.mxu0 0.0
    %715 = vmatpush1.msra.mxu0 0.0
    %716 = vmatprep.subr.mxu0 0.0
    %717 = vmatpush1.msra.mxu0 0.0
    %718 = vmatprep.subr.mxu0 0.0
    %719 = vmatpush1.msra.mxu0 0.0
    %720 = vmatprep.subr.mxu0 0.0
    %721 = vmatpush1.msra.mxu0 0.0
    %722 = vmatprep.subr.mxu0 0.0
    %723 = vmatpush1.msra.mxu0 0.0
    %724 = vmatprep.subr.mxu0 0.0
    %725 = vmatpush1.msra.mxu0 0.0
    %726 = vmatprep.subr.mxu0 0.0
    %727 = vmatpush1.msra.mxu0 0.0
    %728 = vmatprep.subr.mxu0 0.0
    %729 = vmatpush1.msra.mxu0 0.0
    %730 = vmatprep.subr.mxu0 0.0
    %731 = vmatpush1.msra.mxu0 0.0
    %732 = vmatprep.mubr.f32.mxu0 0.0
    %733 = vmatmul.mubr.f32.gmra.mrb[0].mxu0 %v666
    %v734 = vpop.f32.mrb[0].mxu0
    %v735 = vadd.f32 0.0, %v734
    %v736 = vpop.f32.mrb[0].mxu0
    %737 = vdwg.mxu0
    %v738 = vmul.f32 %v662, %v735
    %v739 = vsel %vm540, %v738, 0.0
    %740 = vadd.xlane.f32.xlu0 %v739
    %v741 = vpop.xlane.xlu0 %740
    %v742 = vsub.f32 0.0, %v741
    %v743 = vmax.f32 %v742, 0.0
    %v744 = vand.u32 2147483647, %v741
    %v745 = vsub.f32 0.0, %v744
    %v746 = vmul.f32 %v745, 1.442695
    %v747 = vpow.pop %v746
    %v748 = vadd.f32 %v747, 1.0
    %v749 = vlog2.pop %v748
    %v750 = vmul.f32 %v749, 0.6931472
    %v751 = vadd.f32 %v743, %v750
    %vm752 = vcmask 7168
    %v753 = vsel %vm752, %v751, 0.0
    %754 = vadd.xlane.f32.xlu0 %v753
    %v755 = vpop.xlane.xlu0 %754
    %v756 = vrot.slane %v755, 4
    %v757 = vadd.f32 %v755, %v756
    %v758 = vrot.slane %v757, 2
    %v759 = vadd.f32 %v757, %v758
    %v760 = vrot.slane %v759, 1
    %v761 = vadd.f32 %v759, %v760
    %s762 = vtos %v761
    %s763 = smul.f32 %s762, 0.125
    %s764 = sadd.f32 %s763, %s566
    %s765 = scalar_lea.smem [#allocation2], 0
    %766 = sst [smem:[%s765]] %s764
    // Predicated region
    $region46: #{tpu_custom_call.1} parent=1 // pred_check
      _
    $region47: #{tpu_custom_call.1} parent=1 // pred_check_branch
      %768 = sbr.rel (0) target = $region49
    $region48: #{tpu_custom_call.1} parent=1 // pred_region
      %s770 = ssub.s32 16, 16
      %771 = vsyncadd [#allocation3], %s770
      %774 = dma.smem_to_hbm [#allocation2], 16, %s11, [#allocation3]
    $region49: #{tpu_custom_call.1} parent=1 // pred_fallthru
      _
    // Predicated region
    $region50: #{tpu_custom_call.1} parent=1 // pred_check
      _
    $region51: #{tpu_custom_call.1} parent=1 // pred_check_branch
      %776 = sbr.rel (0) target = $region53
    $region52: #{tpu_custom_call.1} parent=1 // pred_region
      %777 = dma.done [#allocation3], 16
    $region53: #{tpu_custom_call.1} parent=1 // pred_fallthru
      _
    %778 = sfence
    %779 = vsyncpa [#allocation3], 1

</llo_original>
